<compile_context>
chip_gen: v5e
topology: v5e:2x2
jax: 0.10.0
libtpu: 0.0.40
codegen_flags: <defaults>
</compile_context>

<pallas_src>
import functools

import jax
import jax.numpy as jnp
from jax.experimental import pallas as pl
from jax.experimental.pallas import tpu as pltpu


# ----------------------------------------------------------------------------
# Small helpers
# ----------------------------------------------------------------------------
def _cdiv(a: int, b: int) -> int:
    return -(-a // b)


def _round_up(x: int, m: int) -> int:
    return _cdiv(x, m) * m


@functools.lru_cache(maxsize=None)
def _vmem_limit_bytes() -> int:
    """Generation-aware scoped-VMEM limit (v5e/v6e: 96 of 128 MiB; v7x: 48 of 64)."""
    cap = 64 * 1024 * 1024
    try:
        cap = int(getattr(pltpu.get_tpu_info(), "vmem_capacity_bytes", cap))
    except Exception:
        pass
    return max(32 * 1024 * 1024, min(cap * 3 // 4, 96 * 1024 * 1024))


# ----------------------------------------------------------------------------
# Kernel
# ----------------------------------------------------------------------------
def _rope_kernel(cos_ref, snx_ref, spv_ref, q_ref, k_ref, qo_ref, ko_ref):
    """Table blocks: (TS, G) f32.  Data blocks: (TS, G) or (TS, NG, G).

    out[j] = x[j]*cos[j] + x[j+1]*snx[j] + x[j-1]*spv[j] reproduces the complex
    rotation on interleaved (real, imag) pairs; lanes that wrap across pair /
    head / block boundaries always meet an exact-zero sin coefficient.
    """
    g = q_ref.shape[-1]
    lane_axis = q_ref.ndim - 1

    cos, snx, spv = cos_ref[...], snx_ref[...], spv_ref[...]
    if q_ref.ndim == 3:  # (TS, NG, G): broadcast the tables over fused head groups
        cos, snx, spv = cos[:, None, :], snx[:, None, :], spv[:, None, :]

    q, k = q_ref[...], k_ref[...]
    # Pair partners via lane rotations (XLU slot; compute has large slack here).
    # pltpu.roll follows jnp.roll semantics: roll(x, s, ax)[..., j] == x[..., j-s].
    q_next = pltpu.roll(q, g - 1, lane_axis)   # x[j+1] at lane j
    q_prev = pltpu.roll(q, 1, lane_axis)       # x[j-1] at lane j
    k_next = pltpu.roll(k, g - 1, lane_axis)
    k_prev = pltpu.roll(k, 1, lane_axis)

    # bf16 inputs promote to f32 against the f32 tables (torch's .float()),
    # and results are cast back to the input dtype (torch's type_as).
    qo_ref[...] = (q * cos + q_next * snx + q_prev * spv).astype(qo_ref.dtype)
    ko_ref[...] = (k * cos + k_next * snx + k_prev * spv).astype(ko_ref.dtype)


# ----------------------------------------------------------------------------
# Table precompute (the freqs_cis of the torch module, kept as real tables)
# ----------------------------------------------------------------------------
def precompute_rope_tables(dim: int, max_seq_len: int, theta: float = 10000.0):
    """Interleaved-layout rotation tables, each of shape (max_seq_len, dim)."""
    half = dim // 2
    freqs = 1.0 / (theta ** (jnp.arange(0, dim, 2)[:half].astype(jnp.float32) / dim))
    t = jnp.arange(max_seq_len, dtype=jnp.float32)
    ang = jnp.outer(t, freqs)                       # (S, dim // 2)
    cos, sin = jnp.cos(ang), jnp.sin(ang)
    zeros = jnp.zeros_like(sin)
    cos_il = jnp.stack([cos, cos], axis=-1).reshape(max_seq_len, dim)
    sin_next = jnp.stack([-sin, zeros], axis=-1).reshape(max_seq_len, dim)
    sin_prev = jnp.stack([zeros, sin], axis=-1).reshape(max_seq_len, dim)
    return cos_il, sin_next, sin_prev


# ----------------------------------------------------------------------------
# Tiling heuristics
# ----------------------------------------------------------------------------
def _pick_head_group(num_heads: int, head_dim: int) -> int:
    """Smallest #heads whose fused lane width is a multiple of 128.

    Smallest group = narrowest tables = minimal extra HBM read traffic (tables
    are reused across batch and across head groups within a block).
    """
    for hg in range(1, num_heads + 1):
        if num_heads % hg == 0 and (hg * head_dim) % 128 == 0:
            return hg
    return num_heads  # degenerate tiny shapes: fuse everything (full-dim lane)


def _pick_seq_tile(seq_len: int, ng: int, g: int, itemsize: int,
                   vmem_limit: int, *, min_seq_tiles: int = 8) -> int:
    """Largest seq tile that fits the VMEM budget, capped so the grid keeps
    >= min_seq_tiles seq steps (v7x two-TC sharding + pipeline depth)."""
    pack = 8 * max(1, 4 // itemsize)          # sublane pack: 8 f32, 16 bf16, 32 i8
    # Sublane-padded rows of one data plane per seq row (3-D blocks pad NG up to
    # the dtype's sublane pack; 2-D blocks put seq itself on the sublane axis).
    rows = 1 if ng == 1 else _round_up(ng, pack)
    per_row = rows * g * (8 * itemsize        # q,k in + q,k out, double-buffered
                          + 6 * 4)            # in-kernel rolled copies / f32 temps
    per_row += 6 * g * 4                      # 3 f32 table planes, double-buffered
    usable = max(vmem_limit - (4 << 20), vmem_limit // 2)
    ts_cap = max(pack, (usable // per_row) // pack * pack)
    ts_par = max(pack, _round_up(_cdiv(seq_len, min_seq_tiles), pack))
    ts = min(ts_cap, ts_par)
    return seq_len if ts >= seq_len else ts


# ----------------------------------------------------------------------------
# Wrapper
# ----------------------------------------------------------------------------
def apply_rotary_emb(q, k, cos_il, sin_next, sin_prev, *, block_seq=None):
    """Apply interleaved-pair RoPE to q and k of shape [B, S, H, D].

    Tables are (S, G) with G = hg*D for some head-group size hg dividing H
    (RotaryEmbedding builds / caches them).
    """
    B, S, H, D = q.shape
    assert k.shape == q.shape and q.dtype == k.dtype
    assert D % 2 == 0
    Sg, g = cos_il.shape
    assert Sg == S, "seq_len must equal max_seq_len (torch module contract)"
    assert sin_next.shape == (S, g) and sin_prev.shape == (S, g)
    assert g % D == 0 and H % (g // D) == 0
    hg = g // D
    ng = H // hg
    itemsize = jnp.dtype(q.dtype).itemsize

    if block_seq is None:
        ts = _pick_seq_tile(S, ng, g, itemsize, _vmem_limit_bytes())
    else:
        ts = int(block_seq)
        assert 0 < ts <= S and (ts % 8 == 0 or ts == S)

    grid = (pl.cdiv(S, ts), B)    # seq outermost: table blocks reused across batch
    tab_spec = pl.BlockSpec((ts, g), lambda si, bi: (si, 0))

    if ng == 1:                   # all heads fused into the lane dim: 2-D blocks
        qg, kg = q.reshape(B, S, g), k.reshape(B, S, g)
        data_shape = (B, S, g)
        data_spec = pl.BlockSpec((None, ts, g), lambda si, bi: (bi, si, 0))
    else:                         # (TS, NG, G) blocks; lane width multiple of 128
        qg, kg = q.reshape(B, S, ng, g), k.reshape(B, S, ng, g)
        data_shape = (B, S, ng, g)
        data_spec = pl.BlockSpec((None, ts, ng, g), lambda si, bi: (bi, si, 0, 0))

    qo, ko = pl.pallas_call(
        _rope_kernel,
        grid=grid,
        in_specs=[tab_spec, tab_spec, tab_spec, data_spec, data_spec],
        out_specs=(data_spec, data_spec),
        out_shape=(jax.ShapeDtypeStruct(data_shape, q.dtype),
                   jax.ShapeDtypeStruct(data_shape, k.dtype)),
        compiler_params=pltpu.CompilerParams(
            dimension_semantics=("parallel", "parallel"),
            vmem_limit_bytes=_vmem_limit_bytes(),
        ),
    )(cos_il, sin_next, sin_prev, qg, kg)

    return qo.reshape(B, S, H, D), ko.reshape(B, S, H, D)


class RotaryEmbedding:
    """JAX/Pallas counterpart of RotaryEmbeddingTorch (interleaved real/imag pairs)."""

    def __init__(self, dim: int, max_seq_len: int, theta: float = 10000.0):
        self.dim = dim
        self.max_seq_len = max_seq_len
        self.theta = theta
        self._base_tables = precompute_rope_tables(dim, max_seq_len, theta)
        self._tiled = {1: self._base_tables}   # head-group size -> widened tables

    def tables_for_heads(self, num_heads: int):
        hg = _pick_head_group(num_heads, self.dim)
        tabs = self._tiled.get(hg)
        if tabs is None:  # widen once and cache (hoisted out of the per-call path)
            tabs = tuple(jnp.tile(t, (1, hg)) for t in self._base_tables)
            self._tiled[hg] = tabs
        return tabs

    def __call__(self, query, key):
        return apply_rotary_emb(query, key, *self.tables_for_heads(query.shape[2]))


# ----------------------------------------------------------------------------
# Pure-JAX reference (mirrors the PyTorch complex math) and self-test
# ----------------------------------------------------------------------------
def reference_rotary(q, k, theta: float = 10000.0):
    B, S, H, D = q.shape
    P = D // 2
    freqs = 1.0 / (theta ** (jnp.arange(0, D, 2)[:P].astype(jnp.float32) / D))
    ang = jnp.outer(jnp.arange(S, dtype=jnp.float32), freqs)  # (S, P)
    cos = jnp.cos(ang)[None, :, None, :]
    sin = jnp.sin(ang)[None, :, None, :]

    def rot(x):
        x5 = x.astype(jnp.float32).reshape(B, S, H, P, 2)
        xr, xi = x5[..., 0], x5[..., 1]
        out = jnp.stack([xr * cos - xi * sin, xr * sin + xi * cos], axis=-1)
        return out.reshape(B, S, H, D).astype(x.dtype)

    return rot(q), rot(k)


if __name__ == "__main__":
    key = jax.random.PRNGKey(0)

    # Case 1: f32, head-group path (H=8, D=64 -> 128-lane groups, NG=4).
    B, S, H, D = 2, 128, 8, 64
    kq, kk, kb = jax.random.split(key, 3)
    q = jax.random.normal(kq, (B, S, H, D), dtype=jnp.float32)
    k = jax.random.normal(kk, (B, S, H, D), dtype=jnp.float32)
    rope = RotaryEmbedding(D, S)
    q_ref, k_ref = reference_rotary(q, k)

    q_out, k_out = rope(q, k)                    # auto tiling (multi seq tiles)
    jax.block_until_ready((q_out, k_out))
    assert q_out.shape == q.shape and k_out.shape == k.shape
    assert jnp.allclose(q_out, q_ref, atol=1e-5, rtol=1e-5)
    assert jnp.allclose(k_out, k_ref, atol=1e-5, rtol=1e-5)

    # Case 2: non-dividing seq tile (cdiv grid, masked partial last block).
    q_out2, k_out2 = apply_rotary_emb(q, k, *rope.tables_for_heads(H), block_seq=48)
    jax.block_until_ready((q_out2, k_out2))
    assert jnp.allclose(q_out2, q_ref, atol=1e-5, rtol=1e-5)
    assert jnp.allclose(k_out2, k_ref, atol=1e-5, rtol=1e-5)

    # Case 3: bf16, fully fused heads (2-D lane-dense blocks), batch=1.
    B2, S2, H2, D2 = 1, 64, 2, 64
    kq2, kk2 = jax.random.split(kb)
    q2 = jax.random.normal(kq2, (B2, S2, H2, D2), dtype=jnp.bfloat16)
    k2 = jax.random.normal(kk2, (B2, S2, H2, D2), dtype=jnp.bfloat16)
    rope2 = RotaryEmbedding(D2, S2)
    q2_ref, k2_ref = reference_rotary(q2, k2)
    q2_out, k2_out = rope2(q2, k2)
    jax.block_until_ready((q2_out, k2_out))
    assert q2_out.dtype == jnp.bfloat16 and k2_out.dtype == jnp.bfloat16
    assert jnp.allclose(q2_out.astype(jnp.float32), q2_ref.astype(jnp.float32),
                        atol=2e-2, rtol=2e-2)
    assert jnp.allclose(k2_out.astype(jnp.float32), k2_ref.astype(jnp.float32),
                        atol=2e-2, rtol=2e-2)

    print("KERNEL_OK")
</pallas_src>

<mosaic_0001>
module attributes {stable_mosaic.version = 11 : i64} {
  func.func @_rope_kernel(%arg0: i32, %arg1: i32, %arg2: memref<16x128xf32, #tpu.memory_space<vmem>>, %arg3: memref<16x128xf32, #tpu.memory_space<vmem>>, %arg4: memref<16x128xf32, #tpu.memory_space<vmem>>, %arg5: memref<1x16x4x128xf32, #tpu.memory_space<vmem>>, %arg6: memref<1x16x4x128xf32, #tpu.memory_space<vmem>>, %arg7: memref<1x16x4x128xf32, #tpu.memory_space<vmem>>, %arg8: memref<1x16x4x128xf32, #tpu.memory_space<vmem>>) attributes {dimension_semantics = [#tpu.dimension_semantics<parallel>, #tpu.dimension_semantics<parallel>], iteration_bounds = array<i64: 8, 2>, scalar_prefetch = 0 : i64, scratch_operands = 0 : i64, tpu.core_type = #tpu.core_type<tc>, window_params = [{transform_indices = @transform_0, window_bounds = array<i64: 16, 128>}, {transform_indices = @transform_1, window_bounds = array<i64: 16, 128>}, {transform_indices = @transform_2, window_bounds = array<i64: 16, 128>}, {transform_indices = @transform_3, window_bounds = array<i64: 1, 16, 4, 128>}, {transform_indices = @transform_4, window_bounds = array<i64: 1, 16, 4, 128>}, {transform_indices = @transform_5, window_bounds = array<i64: 1, 16, 4, 128>}, {transform_indices = @transform_6, window_bounds = array<i64: 1, 16, 4, 128>}]} {
    %c0 = arith.constant 0 : index
    %c0_0 = arith.constant 0 : index
    %0 = vector.load %arg2[%c0, %c0_0] : memref<16x128xf32, #tpu.memory_space<vmem>>, vector<16x128xf32>
    %c0_1 = arith.constant 0 : index
    %c0_2 = arith.constant 0 : index
    %1 = vector.load %arg3[%c0_1, %c0_2] : memref<16x128xf32, #tpu.memory_space<vmem>>, vector<16x128xf32>
    %c0_3 = arith.constant 0 : index
    %c0_4 = arith.constant 0 : index
    %2 = vector.load %arg4[%c0_3, %c0_4] : memref<16x128xf32, #tpu.memory_space<vmem>>, vector<16x128xf32>
    %3 = vector.shape_cast %0 : vector<16x128xf32> to vector<16x1x128xf32>
    %4 = vector.shape_cast %1 : vector<16x128xf32> to vector<16x1x128xf32>
    %5 = vector.shape_cast %2 : vector<16x128xf32> to vector<16x1x128xf32>
    %c0_5 = arith.constant 0 : index
    %c0_6 = arith.constant 0 : index
    %c0_7 = arith.constant 0 : index
    %c0_8 = arith.constant 0 : index
    %6 = vector.load %arg5[%c0_5, %c0_6, %c0_7, %c0_8] : memref<1x16x4x128xf32, #tpu.memory_space<vmem>>, vector<1x16x4x128xf32>
    %7 = vector.shape_cast %6 : vector<1x16x4x128xf32> to vector<16x4x128xf32>
    %c0_9 = arith.constant 0 : index
    %c0_10 = arith.constant 0 : index
    %c0_11 = arith.constant 0 : index
    %c0_12 = arith.constant 0 : index
    %8 = vector.load %arg6[%c0_9, %c0_10, %c0_11, %c0_12] : memref<1x16x4x128xf32, #tpu.memory_space<vmem>>, vector<1x16x4x128xf32>
    %9 = vector.shape_cast %8 : vector<1x16x4x128xf32> to vector<16x4x128xf32>
    %c127_i32 = arith.constant 127 : i32
    %10 = tpu.dynamic_rotate %7 by %c127_i32 dim 2 : vector<16x4x128xf32>, i32 -> vector<16x4x128xf32>
    %c1_i32 = arith.constant 1 : i32
    %11 = tpu.dynamic_rotate %7 by %c1_i32 dim 2 : vector<16x4x128xf32>, i32 -> vector<16x4x128xf32>
    %c127_i32_13 = arith.constant 127 : i32
    %12 = tpu.dynamic_rotate %9 by %c127_i32_13 dim 2 : vector<16x4x128xf32>, i32 -> vector<16x4x128xf32>
    %c1_i32_14 = arith.constant 1 : i32
    %13 = tpu.dynamic_rotate %9 by %c1_i32_14 dim 2 : vector<16x4x128xf32>, i32 -> vector<16x4x128xf32>
    %14 = vector.broadcast %3 : vector<16x1x128xf32> to vector<16x4x128xf32>
    %15 = arith.mulf %7, %14 : vector<16x4x128xf32>
    %16 = vector.broadcast %4 : vector<16x1x128xf32> to vector<16x4x128xf32>
    %17 = arith.mulf %10, %16 : vector<16x4x128xf32>
    %18 = arith.addf %15, %17 : vector<16x4x128xf32>
    %19 = vector.broadcast %5 : vector<16x1x128xf32> to vector<16x4x128xf32>
    %20 = arith.mulf %11, %19 : vector<16x4x128xf32>
    %21 = arith.addf %18, %20 : vector<16x4x128xf32>
    %c0_15 = arith.constant 0 : index
    %c0_16 = arith.constant 0 : index
    %c0_17 = arith.constant 0 : index
    %c0_18 = arith.constant 0 : index
    %22 = vector.load %arg7[%c0_15, %c0_16, %c0_17, %c0_18] : memref<1x16x4x128xf32, #tpu.memory_space<vmem>>, vector<1x16x4x128xf32>
    %23 = vector.shape_cast %22 : vector<1x16x4x128xf32> to vector<16x4x128xf32>
    %24 = vector.shape_cast %21 : vector<16x4x128xf32> to vector<1x16x4x128xf32>
    tpu.vector_store %arg7[%c0_15, %c0_16, %c0_17, %c0_18], %24 {strides = array<i32>} : memref<1x16x4x128xf32, #tpu.memory_space<vmem>>, vector<1x16x4x128xf32>,
    %25 = vector.broadcast %3 : vector<16x1x128xf32> to vector<16x4x128xf32>
    %26 = arith.mulf %9, %25 : vector<16x4x128xf32>
    %27 = vector.broadcast %4 : vector<16x1x128xf32> to vector<16x4x128xf32>
    %28 = arith.mulf %12, %27 : vector<16x4x128xf32>
    %29 = arith.addf %26, %28 : vector<16x4x128xf32>
    %30 = vector.broadcast %5 : vector<16x1x128xf32> to vector<16x4x128xf32>
    %31 = arith.mulf %13, %30 : vector<16x4x128xf32>
    %32 = arith.addf %29, %31 : vector<16x4x128xf32>
    %c0_19 = arith.constant 0 : index
    %c0_20 = arith.constant 0 : index
    %c0_21 = arith.constant 0 : index
    %c0_22 = arith.constant 0 : index
    %33 = vector.load %arg8[%c0_19, %c0_20, %c0_21, %c0_22] : memref<1x16x4x128xf32, #tpu.memory_space<vmem>>, vector<1x16x4x128xf32>
    %34 = vector.shape_cast %33 : vector<1x16x4x128xf32> to vector<16x4x128xf32>
    %35 = vector.shape_cast %32 : vector<16x4x128xf32> to vector<1x16x4x128xf32>
    tpu.vector_store %arg8[%c0_19, %c0_20, %c0_21, %c0_22], %35 {strides = array<i32>} : memref<1x16x4x128xf32, #tpu.memory_space<vmem>>, vector<1x16x4x128xf32>,
    return
  }
  func.func @transform_0(%arg0: i32, %arg1: i32) -> (i32, i32) {
    %c0_i32 = arith.constant 0 : i32
    %c0_i32_0 = arith.constant 0 : i32
    return %arg0, %c0_i32 : i32, i32
  }
  func.func @transform_1(%arg0: i32, %arg1: i32) -> (i32, i32) {
    %c0_i32 = arith.constant 0 : i32
    %c0_i32_0 = arith.constant 0 : i32
    return %arg0, %c0_i32 : i32, i32
  }
  func.func @transform_2(%arg0: i32, %arg1: i32) -> (i32, i32) {
    %c0_i32 = arith.constant 0 : i32
    %c0_i32_0 = arith.constant 0 : i32
    return %arg0, %c0_i32 : i32, i32
  }
  func.func @transform_3(%arg0: i32, %arg1: i32) -> (i32, i32, i32, i32) {
    %c0_i32 = arith.constant 0 : i32
    %c0_i32_0 = arith.constant 0 : i32
    %c0_i32_1 = arith.constant 0 : i32
    return %arg1, %arg0, %c0_i32, %c0_i32_0 : i32, i32, i32, i32
  }
  func.func @transform_4(%arg0: i32, %arg1: i32) -> (i32, i32, i32, i32) {
    %c0_i32 = arith.constant 0 : i32
    %c0_i32_0 = arith.constant 0 : i32
    %c0_i32_1 = arith.constant 0 : i32
    return %arg1, %arg0, %c0_i32, %c0_i32_0 : i32, i32, i32, i32
  }
  func.func @transform_5(%arg0: i32, %arg1: i32) -> (i32, i32, i32, i32) {
    %c0_i32 = arith.constant 0 : i32
    %c0_i32_0 = arith.constant 0 : i32
    %c0_i32_1 = arith.constant 0 : i32
    return %arg1, %arg0, %c0_i32, %c0_i32_0 : i32, i32, i32, i32
  }
  func.func @transform_6(%arg0: i32, %arg1: i32) -> (i32, i32, i32, i32) {
    %c0_i32 = arith.constant 0 : i32
    %c0_i32_0 = arith.constant 0 : i32
    %c0_i32_1 = arith.constant 0 : i32
    return %arg1, %arg0, %c0_i32, %c0_i32_0 : i32, i32, i32, i32
  }
}

</mosaic_0001>

<llo_original>
// kernel: tpu_custom_call.1
$region0: #{tpu_custom_call.1}
  #allocation0 [shape = 'u32[]', space=smem, size = 0x4, offset = 0x4, fixed_abs, tag = 'smem constant byte address 0x4 - core index']
  #allocation1 [shape = 'u32[72,128]{1,0:T(1,128)}', space=vmem, size = 0x9000, scoped, tag = 'internal scratch']
  %s0 = inlined_call_operand.hbm [shape: f32[128,128], index: 0, kind: input, shape index: {}]
  %s1 = inlined_call_operand.hbm [shape: f32[128,128], index: 1, kind: input, shape index: {}]
  %s2 = inlined_call_operand.hbm [shape: f32[128,128], index: 2, kind: input, shape index: {}]
  %s3 = inlined_call_operand.hbm [shape: f32[2,128,4,128], index: 3, kind: input, shape index: {}]
  %s4 = inlined_call_operand.hbm [shape: f32[2,128,4,128], index: 4, kind: input, shape index: {}]
  %s5 = inlined_call_operand.hbm [shape: f32[2,128,4,128], index: 5, kind: output, shape index: {0}]
  %s6 = inlined_call_operand.hbm [shape: f32[2,128,4,128], index: 6, kind: output, shape index: {1}]
  %7 = xla_tuple %s5, %s6
  %s8 = sld [smem:[#allocation0]]
  $region81: #{tpu_custom_call.1} parent=0
    _
  %s10 = ssub.s32 1, %s8
  %s11 = scalar_select 0, %s10, %s8
  $region1: #{tpu_custom_call.1} parent=0
    #allocation2 [shape = 'u8[16384]{0}', space=vmem, size = 0x4000, scoped, tag = 'input window, operand 0']
    #allocation3 [shape = 's32[2]{0}', space=sflag, size = 0x8, scoped, tag = 'scoped memory for tpu_custom_call.1']
    #allocation4 [shape = 's32[2]{0}', space=sflag, size = 0x8, scoped, tag = 'scoped memory for tpu_custom_call.1']
    #allocation5 [shape = 'u8[16384]{0}', space=vmem, size = 0x4000, scoped, tag = 'input window, operand 1']
    #allocation6 [shape = 's32[2]{0}', space=sflag, size = 0x8, scoped, tag = 'scoped memory for tpu_custom_call.1']
    #allocation7 [shape = 'u8[16384]{0}', space=vmem, size = 0x4000, scoped, tag = 'input window, operand 2']
    #allocation8 [shape = 'u8[65536]{0}', space=vmem, size = 0x10000, scoped, tag = 'input window, operand 3']
    #allocation9 [shape = 's32[2]{0}', space=sflag, size = 0x8, scoped, tag = 'scoped memory for tpu_custom_call.1']
    #allocation10 [shape = 'u8[65536]{0}', space=vmem, size = 0x10000, scoped, tag = 'input window, operand 4']
    #allocation11 [shape = 'u8[65536]{0}', space=vmem, size = 0x10000, scoped, tag = 'output window, operand 0']
    #allocation12 [shape = 'u8[65536]{0}', space=vmem, size = 0x10000, scoped, tag = 'output window, operand 1']
    #allocation13 [shape = 's32[2]{0}', space=sflag, size = 0x8, scoped, tag = 'scoped memory for tpu_custom_call.1']
    %12 = vsyncpa [#allocation3], 0
    %s13 = scalar_lea.sflag [#allocation3], 1
    %14 = vsyncpa %s13, 0
    %15 = vsyncpa [#allocation6], 0
    %s16 = scalar_lea.sflag [#allocation6], 1
    %17 = vsyncpa %s16, 0
    %18 = vsyncpa [#allocation9], 0
    %s19 = scalar_lea.sflag [#allocation9], 1
    %20 = vsyncpa %s19, 0
    %21 = vsyncpa [#allocation4], 0
    %s22 = scalar_lea.sflag [#allocation4], 1
    %23 = vsyncpa %s22, 0
    %24 = vsyncpa [#allocation13], 0
    %s25 = scalar_lea.sflag [#allocation13], 1
    %26 = vsyncpa %s25, 0
    loop: start=0, step=1, limit=18
    $region2: #{tpu_custom_call.1} parent=1 // loop_pre_header
      _
    $region3: #{tpu_custom_call.1} parent=1 // loop_header
      %s28 = sphi 0, %s32
      %p29 = scmp.ge.s32.totalorder %s28, 18
      %s35 = sphi 0, %s47
      %s36 = sphi 0, %s43
      %s37 = sphi 0, %s35
      %s38 = sphi 0, %s36
      %s39 = sphi 0, %s37
      %s40 = sphi 0, %s38
      %s50 = sphi 0, %s52
      %s53 = sphi 0, %s50
      %s54 = sphi 0, %s53
      %s70 = sphi 0, %s54
      %s76 = sphi 0, %s78
      %s79 = sphi 0, %s76
      %s80 = sphi 0, %s79
      %s96 = sphi 0, %s80
      %s102 = sphi 0, %s104
      %s105 = sphi 0, %s102
      %s106 = sphi 0, %s105
      %s122 = sphi 0, %s106
      %s130 = sphi 0, %s132
      %s133 = sphi 0, %s130
      %s134 = sphi 0, %s133
      %s150 = sphi 0, %s134
      %s158 = sphi 0, %s160
      %s161 = sphi 0, %s158
      %s162 = sphi 0, %s161
      %s178 = sphi 0, %s162
      %s186 = sphi 0, %s188
      %s189 = sphi 0, %s186
      %s190 = sphi 0, %s189
      %s206 = sphi 0, %s190
      %s214 = sphi 0, %s216
      %s217 = sphi 0, %s214
      %s218 = sphi 0, %s217
      %s234 = sphi 0, %s218
    $region4: #{tpu_custom_call.1} parent=1 // loop_header_branch
      %31 = sbr.rel (%p29) target = $region8
    $region5: #{tpu_custom_call.1} parent=1 // loop_body
      %s33 = ssub.s32 %s28, 1
      %s34 = ssub.s32 %s28, 2
      %s41 = sadd.s32 1, %s36
      %p42 = scmp.ge.s32.totalorder %s41, 2
      %s43 = scalar_select %p42, 0, %s41
      %s44 = sadd.s32 1, %s35
      %s45 = scalar_select %p42, %s44, %s35
      %p46 = scmp.ge.s32.totalorder %s45, 8
      %s47 = scalar_select %p46, 0, %s45
      %s48 = ssub.s32 %s35, %s47
      %p49 = scmp.eq.s32.totalorder %s48, 0
      %s51 = sadd.s32 %s50, 1
      %s52 = scalar_select %p49, %s50, %s51
      %p55 = pneg %p49
      %p56 = scmp.eq.s32.totalorder %s28, 15
      %p57 = por %p55, %p56
      %p58 = scmp.ne.s32.totalorder %s50, %s53
      %p59 = scmp.eq.s32.totalorder %s28, 0
      %p60 = por %p58, %p59
      %p61 = scmp.ne.s32.totalorder %s50, %s53
      %p62 = scmp.eq.s32.totalorder %s33, 15
      %p63 = por %p61, %p62
      %p64 = scmp.ne.s32.totalorder %s53, %s54
      %p65 = scmp.eq.s32.totalorder %s33, 0
      %p66 = por %p64, %p65
      %p67 = scmp.ne.s32.totalorder %s53, %s54
      %p68 = scmp.eq.s32.totalorder %s34, 15
      %p69 = por %p67, %p68
      %p71 = scmp.ne.s32.totalorder %s54, %s70
      %p72 = scmp.eq.s32.totalorder %s34, 0
      %p73 = por %p71, %p72
      %s74 = ssub.s32 %s35, %s47
      %p75 = scmp.eq.s32.totalorder %s74, 0
      %s77 = sadd.s32 %s76, 1
      %s78 = scalar_select %p75, %s76, %s77
      %p81 = pneg %p75
      %p82 = scmp.eq.s32.totalorder %s28, 15
      %p83 = por %p81, %p82
      %p84 = scmp.ne.s32.totalorder %s76, %s79
      %p85 = scmp.eq.s32.totalorder %s28, 0
      %p86 = por %p84, %p85
      %p87 = scmp.ne.s32.totalorder %s76, %s79
      %p88 = scmp.eq.s32.totalorder %s33, 15
      %p89 = por %p87, %p88
      %p90 = scmp.ne.s32.totalorder %s79, %s80
      %p91 = scmp.eq.s32.totalorder %s33, 0
      %p92 = por %p90, %p91
      %p93 = scmp.ne.s32.totalorder %s79, %s80
      %p94 = scmp.eq.s32.totalorder %s34, 15
      %p95 = por %p93, %p94
      %p97 = scmp.ne.s32.totalorder %s80, %s96
      %p98 = scmp.eq.s32.totalorder %s34, 0
      %p99 = por %p97, %p98
      %s100 = ssub.s32 %s35, %s47
      %p101 = scmp.eq.s32.totalorder %s100, 0
      %s103 = sadd.s32 %s102, 1
      %s104 = scalar_select %p101, %s102, %s103
      %p107 = pneg %p101
      %p108 = scmp.eq.s32.totalorder %s28, 15
      %p109 = por %p107, %p108
      %p110 = scmp.ne.s32.totalorder %s102, %s105
      %p111 = scmp.eq.s32.totalorder %s28, 0
      %p112 = por %p110, %p111
      %p113 = scmp.ne.s32.totalorder %s102, %s105
      %p114 = scmp.eq.s32.totalorder %s33, 15
      %p115 = por %p113, %p114
      %p116 = scmp.ne.s32.totalorder %s105, %s106
      %p117 = scmp.eq.s32.totalorder %s33, 0
      %p118 = por %p116, %p117
      %p119 = scmp.ne.s32.totalorder %s105, %s106
      %p120 = scmp.eq.s32.totalorder %s34, 15
      %p121 = por %p119, %p120
      %p123 = scmp.ne.s32.totalorder %s106, %s122
      %p124 = scmp.eq.s32.totalorder %s34, 0
      %p125 = por %p123, %p124
      %s126 = ssub.s32 %s36, %s43
      %s127 = ssub.s32 %s35, %s47
      %s128 = sor.u32 %s126, %s127
      %p129 = scmp.eq.s32.totalorder %s128, 0
      %s131 = sadd.s32 %s130, 1
      %s132 = scalar_select %p129, %s130, %s131
      %p135 = pneg %p129
      %p136 = scmp.eq.s32.totalorder %s28, 15
      %p137 = por %p135, %p136
      %p138 = scmp.ne.s32.totalorder %s130, %s133
      %p139 = scmp.eq.s32.totalorder %s28, 0
      %p140 = por %p138, %p139
      %p141 = scmp.ne.s32.totalorder %s130, %s133
      %p142 = scmp.eq.s32.totalorder %s33, 15
      %p143 = por %p141, %p142
      %p144 = scmp.ne.s32.totalorder %s133, %s134
      %p145 = scmp.eq.s32.totalorder %s33, 0
      %p146 = por %p144, %p145
      %p147 = scmp.ne.s32.totalorder %s133, %s134
      %p148 = scmp.eq.s32.totalorder %s34, 15
      %p149 = por %p147, %p148
      %p151 = scmp.ne.s32.totalorder %s134, %s150
      %p152 = scmp.eq.s32.totalorder %s34, 0
      %p153 = por %p151, %p152
      %s154 = ssub.s32 %s36, %s43
      %s155 = ssub.s32 %s35, %s47
      %s156 = sor.u32 %s154, %s155
      %p157 = scmp.eq.s32.totalorder %s156, 0
      %s159 = sadd.s32 %s158, 1
      %s160 = scalar_select %p157, %s158, %s159
      %p163 = pneg %p157
      %p164 = scmp.eq.s32.totalorder %s28, 15
      %p165 = por %p163, %p164
      %p166 = scmp.ne.s32.totalorder %s158, %s161
      %p167 = scmp.eq.s32.totalorder %s28, 0
      %p168 = por %p166, %p167
      %p169 = scmp.ne.s32.totalorder %s158, %s161
      %p170 = scmp.eq.s32.totalorder %s33, 15
      %p171 = por %p169, %p170
      %p172 = scmp.ne.s32.totalorder %s161, %s162
      %p173 = scmp.eq.s32.totalorder %s33, 0
      %p174 = por %p172, %p173
      %p175 = scmp.ne.s32.totalorder %s161, %s162
      %p176 = scmp.eq.s32.totalorder %s34, 15
      %p177 = por %p175, %p176
      %p179 = scmp.ne.s32.totalorder %s162, %s178
      %p180 = scmp.eq.s32.totalorder %s34, 0
      %p181 = por %p179, %p180
      %s182 = ssub.s32 %s36, %s43
      %s183 = ssub.s32 %s35, %s47
      %s184 = sor.u32 %s182, %s183
      %p185 = scmp.eq.s32.totalorder %s184, 0
      %s187 = sadd.s32 %s186, 1
      %s188 = scalar_select %p185, %s186, %s187
      %p191 = pneg %p185
      %p192 = scmp.eq.s32.totalorder %s28, 15
      %p193 = por %p191, %p192
      %p194 = scmp.ne.s32.totalorder %s186, %s189
      %p195 = scmp.eq.s32.totalorder %s28, 0
      %p196 = por %p194, %p195
      %p197 = scmp.ne.s32.totalorder %s186, %s189
      %p198 = scmp.eq.s32.totalorder %s33, 15
      %p199 = por %p197, %p198
      %p200 = scmp.ne.s32.totalorder %s189, %s190
      %p201 = scmp.eq.s32.totalorder %s33, 0
      %p202 = por %p200, %p201
      %p203 = scmp.ne.s32.totalorder %s189, %s190
      %p204 = scmp.eq.s32.totalorder %s34, 15
      %p205 = por %p203, %p204
      %p207 = scmp.ne.s32.totalorder %s190, %s206
      %p208 = scmp.eq.s32.totalorder %s34, 0
      %p209 = por %p207, %p208
      %s210 = ssub.s32 %s36, %s43
      %s211 = ssub.s32 %s35, %s47
      %s212 = sor.u32 %s210, %s211
      %p213 = scmp.eq.s32.totalorder %s212, 0
      %s215 = sadd.s32 %s214, 1
      %s216 = scalar_select %p213, %s214, %s215
      %p219 = pneg %p213
      %p220 = scmp.eq.s32.totalorder %s28, 15
      %p221 = por %p219, %p220
      %p222 = scmp.ne.s32.totalorder %s214, %s217
      %p223 = scmp.eq.s32.totalorder %s28, 0
      %p224 = por %p222, %p223
      %p225 = scmp.ne.s32.totalorder %s214, %s217
      %p226 = scmp.eq.s32.totalorder %s33, 15
      %p227 = por %p225, %p226
      %p228 = scmp.ne.s32.totalorder %s217, %s218
      %p229 = scmp.eq.s32.totalorder %s33, 0
      %p230 = por %p228, %p229
      %p231 = scmp.ne.s32.totalorder %s217, %s218
      %p232 = scmp.eq.s32.totalorder %s34, 15
      %p233 = por %p231, %p232
      %p235 = scmp.ne.s32.totalorder %s218, %s234
      %p236 = scmp.eq.s32.totalorder %s34, 0
      %p237 = por %p235, %p236
      %p238 = scmp.le.s32.totalorder 1, %s28
      %p239 = scmp.lt.s32.totalorder %s28, 17
      %p240 = pnand %p238, %p239
      %p241 = pneg %p240
      // Predicated region
      $region9: #{tpu_custom_call.1} parent=5 // pred_check
        _
      $region10: #{tpu_custom_call.1} parent=5 // pred_check_branch
        %243 = sbr.rel (%p240) target = $region12
      $region11: #{tpu_custom_call.1} parent=5 // pred_region
        %s244 = ssub.s32 %s28, 1
      $region12: #{tpu_custom_call.1} parent=5 // pred_fallthru
        _
      %p245 = scmp.lt.s32.totalorder %s28, 16
      // Predicated region
      $region13: #{tpu_custom_call.1} parent=5 // pred_check
        %p246 = pneg %p245
      $region14: #{tpu_custom_call.1} parent=5 // pred_check_branch
        %248 = sbr.rel (%p246) target = $region16
      $region15: #{tpu_custom_call.1} parent=5 // pred_region
        // Predicated region
        $region17: #{tpu_custom_call.1} parent=15 // pred_check
          %p249 = pneg %p60
        $region18: #{tpu_custom_call.1} parent=15 // pred_check_branch
          %251 = sbr.rel (%p249) target = $region20
        $region19: #{tpu_custom_call.1} parent=15 // pred_region
          %s252 = sand.u32 %s50, 1
          %s253 = scalar_lea.sflag [#allocation3], %s252
          %s254 = sand.u32 %s50, 1
          %s255 = smul.addr %s254, 16
          %s256 = scalar_lea.vmem [#allocation2], %s255
          %s257 = smul.u32 2, %s35
          %259 = vsyncadd %s253, 0
          %s260 = smul.addr %s257, 8
          %s261 = scalar_lea.hbm %s0, %s260
          %s262 = sshll.u32 %s261, 4
          %s263 = int_to_ptr.hbm [resolvable:$true] %s262
          %s264 = sshll.u32 %s256, 4
          %s265 = int_to_ptr.vmem [resolvable:$true] %s264
          %270 = dma.hbm_to_vmem [thread:$0]  %s263, 256, %s265, %s253, 128, 128, 8
        $region20: #{tpu_custom_call.1} parent=15 // pred_fallthru
          _
        // Predicated region
        $region21: #{tpu_custom_call.1} parent=15 // pred_check
          %p271 = pneg %p86
        $region22: #{tpu_custom_call.1} parent=15 // pred_check_branch
          %273 = sbr.rel (%p271) target = $region24
        $region23: #{tpu_custom_call.1} parent=15 // pred_region
          %s274 = sand.u32 %s28, 1
          %s275 = scalar_lea.sflag [#allocation6], %s274
          %s276 = sand.u32 %s76, 1
          %s277 = smul.addr %s276, 16
          %s278 = scalar_lea.vmem [#allocation5], %s277
          %s279 = smul.u32 2, %s35
          %281 = vsyncadd %s275, 0
          %s282 = smul.addr %s279, 8
          %s283 = scalar_lea.hbm %s1, %s282
          %s284 = sshll.u32 %s283, 4
          %s285 = int_to_ptr.hbm [resolvable:$true] %s284
          %s286 = sshll.u32 %s278, 4
          %s287 = int_to_ptr.vmem [resolvable:$true] %s286
          %292 = dma.hbm_to_vmem [thread:$0]  %s285, 256, %s287, %s275, 128, 128, 8
        $region24: #{tpu_custom_call.1} parent=15 // pred_fallthru
          _
        // Predicated region
        $region25: #{tpu_custom_call.1} parent=15 // pred_check
          %p293 = pneg %p112
        $region26: #{tpu_custom_call.1} parent=15 // pred_check_branch
          %295 = sbr.rel (%p293) target = $region28
        $region27: #{tpu_custom_call.1} parent=15 // pred_region
          %s296 = sand.u32 %s28, 1
          %s297 = scalar_lea.sflag [#allocation6], %s296
          %s298 = sand.u32 %s102, 1
          %s299 = smul.addr %s298, 16
          %s300 = scalar_lea.vmem [#allocation7], %s299
          %s301 = smul.u32 2, %s35
          %303 = vsyncadd %s297, 0
          %s304 = smul.addr %s301, 8
          %s305 = scalar_lea.hbm %s2, %s304
          %s306 = sshll.u32 %s305, 4
          %s307 = int_to_ptr.hbm [resolvable:$true] %s306
          %s308 = sshll.u32 %s300, 4
          %s309 = int_to_ptr.vmem [resolvable:$true] %s308
          %314 = dma.hbm_to_vmem [thread:$0]  %s307, 256, %s309, %s297, 128, 128, 8
        $region28: #{tpu_custom_call.1} parent=15 // pred_fallthru
          _
        // Predicated region
        $region29: #{tpu_custom_call.1} parent=15 // pred_check
          %p315 = pneg %p140
        $region30: #{tpu_custom_call.1} parent=15 // pred_check_branch
          %317 = sbr.rel (%p315) target = $region32
        $region31: #{tpu_custom_call.1} parent=15 // pred_region
          %s318 = sand.u32 %s28, 1
          %s319 = scalar_lea.sflag [#allocation9], %s318
          %s320 = sand.u32 %s130, 1
          %s321 = smul.addr %s320, 64
          %s322 = scalar_lea.vmem [#allocation8], %s321
          %s323 = smul.u32 16, %s35
          %325 = vsyncadd %s319, 0
          %s326 = smul.addr %s36, 128
          %s327 = sadd.s32 %s323, %s326
          %s328 = smul.addr %s327, 4
          %s329 = scalar_lea.hbm %s3, %s328
          %s330 = sshll.u32 %s329, 4
          %s331 = int_to_ptr.hbm [resolvable:$true] %s330
          %s332 = sshll.u32 %s322, 4
          %s333 = int_to_ptr.vmem [resolvable:$true] %s332
          %338 = dma.hbm_to_vmem [thread:$0]  %s331, 1024, %s333, %s319, 64, 64, 4
        $region32: #{tpu_custom_call.1} parent=15 // pred_fallthru
          _
        // Predicated region
        $region33: #{tpu_custom_call.1} parent=15 // pred_check
          %p339 = pneg %p168
        $region34: #{tpu_custom_call.1} parent=15 // pred_check_branch
          %341 = sbr.rel (%p339) target = $region36
        $region35: #{tpu_custom_call.1} parent=15 // pred_region
          %s342 = sand.u32 %s28, 1
          %s343 = scalar_lea.sflag [#allocation9], %s342
          %s344 = sand.u32 %s158, 1
          %s345 = smul.addr %s344, 64
          %s346 = scalar_lea.vmem [#allocation10], %s345
          %s347 = smul.u32 16, %s35
          %349 = vsyncadd %s343, 0
          %s350 = smul.addr %s36, 128
          %s351 = sadd.s32 %s347, %s350
          %s352 = smul.addr %s351, 4
          %s353 = scalar_lea.hbm %s4, %s352
          %s354 = sshll.u32 %s353, 4
          %s355 = int_to_ptr.hbm [resolvable:$true] %s354
          %s356 = sshll.u32 %s346, 4
          %s357 = int_to_ptr.vmem [resolvable:$true] %s356
          %362 = dma.hbm_to_vmem [thread:$0]  %s355, 1024, %s357, %s343, 64, 64, 4
        $region36: #{tpu_custom_call.1} parent=15 // pred_fallthru
          _
      $region16: #{tpu_custom_call.1} parent=5 // pred_fallthru
        _
      %p363 = scmp.le.s32.totalorder 1, %s28
      %p364 = scmp.lt.s32.totalorder %s28, 17
      %p365 = pnand %p363, %p364
      %p366 = pneg %p365
      // Predicated region
      $region37: #{tpu_custom_call.1} parent=5 // pred_check
        _
      $region38: #{tpu_custom_call.1} parent=5 // pred_check_branch
        %368 = sbr.rel (%p365) target = $region40
      $region39: #{tpu_custom_call.1} parent=5 // pred_region
        %s369 = ssub.s32 %s28, 1
        %s370 = sand.u32 %s53, 1
        %s371 = scalar_lea.sflag [#allocation3], %s370
        %s372 = sand.u32 %s53, 1
        %s373 = smul.addr %s372, 16
        %s374 = scalar_lea.vmem [#allocation2], %s373
        // Predicated region
        $region41: #{tpu_custom_call.1} parent=39 // pred_check
          %p375 = pneg %p66
        $region42: #{tpu_custom_call.1} parent=39 // pred_check_branch
          %377 = sbr.rel (%p375) target = $region44
        $region43: #{tpu_custom_call.1} parent=39 // pred_region
          %379 = dma.done %s371, 256
        $region44: #{tpu_custom_call.1} parent=39 // pred_fallthru
          _
        %s380 = sand.u32 %s33, 1
        %s381 = scalar_lea.sflag [#allocation6], %s380
        %s382 = sand.u32 %s79, 1
        %s383 = smul.addr %s382, 16
        %s384 = scalar_lea.vmem [#allocation5], %s383
        // Predicated region
        $region45: #{tpu_custom_call.1} parent=39 // pred_check
          %p385 = pneg %p92
        $region46: #{tpu_custom_call.1} parent=39 // pred_check_branch
          %387 = sbr.rel (%p385) target = $region48
        $region47: #{tpu_custom_call.1} parent=39 // pred_region
          %389 = dma.done %s381, 256
        $region48: #{tpu_custom_call.1} parent=39 // pred_fallthru
          _
        %s390 = sand.u32 %s33, 1
        %s391 = scalar_lea.sflag [#allocation6], %s390
        %s392 = sand.u32 %s105, 1
        %s393 = smul.addr %s392, 16
        %s394 = scalar_lea.vmem [#allocation7], %s393
        // Predicated region
        $region49: #{tpu_custom_call.1} parent=39 // pred_check
          %p395 = pneg %p118
        $region50: #{tpu_custom_call.1} parent=39 // pred_check_branch
          %397 = sbr.rel (%p395) target = $region52
        $region51: #{tpu_custom_call.1} parent=39 // pred_region
          %399 = dma.done %s391, 256
        $region52: #{tpu_custom_call.1} parent=39 // pred_fallthru
          _
        %s400 = sand.u32 %s33, 1
        %s401 = scalar_lea.sflag [#allocation9], %s400
        %s402 = sand.u32 %s133, 1
        %s403 = smul.addr %s402, 64
        %s404 = scalar_lea.vmem [#allocation8], %s403
        // Predicated region
        $region53: #{tpu_custom_call.1} parent=39 // pred_check
          %p405 = pneg %p146
        $region54: #{tpu_custom_call.1} parent=39 // pred_check_branch
          %407 = sbr.rel (%p405) target = $region56
        $region55: #{tpu_custom_call.1} parent=39 // pred_region
          %409 = dma.done %s401, 1024
        $region56: #{tpu_custom_call.1} parent=39 // pred_fallthru
          _
        %s410 = sand.u32 %s33, 1
        %s411 = scalar_lea.sflag [#allocation9], %s410
        %s412 = sand.u32 %s161, 1
        %s413 = smul.addr %s412, 64
        %s414 = scalar_lea.vmem [#allocation10], %s413
        // Predicated region
        $region57: #{tpu_custom_call.1} parent=39 // pred_check
          %p415 = pneg %p174
        $region58: #{tpu_custom_call.1} parent=39 // pred_check_branch
          %417 = sbr.rel (%p415) target = $region60
        $region59: #{tpu_custom_call.1} parent=39 // pred_region
          %419 = dma.done %s411, 1024
        $region60: #{tpu_custom_call.1} parent=39 // pred_fallthru
          _
        %s420 = sand.u32 %s53, 1
        %s421 = scalar_lea.sflag [#allocation3], %s420
        %s422 = sand.u32 %s53, 1
        %s423 = smul.addr %s422, 16
        %s424 = scalar_lea.vmem [#allocation2], %s423
        %p425 = pneg %p66
        %p426 = pneg %p63
        %s427 = sand.u32 %s33, 1
        %s428 = scalar_lea.sflag [#allocation6], %s427
        %s429 = sand.u32 %s79, 1
        %s430 = smul.addr %s429, 16
        %s431 = scalar_lea.vmem [#allocation5], %s430
        %p432 = pneg %p92
        %p433 = pneg %p89
        %s434 = sand.u32 %s33, 1
        %s435 = scalar_lea.sflag [#allocation6], %s434
        %s436 = sand.u32 %s105, 1
        %s437 = smul.addr %s436, 16
        %s438 = scalar_lea.vmem [#allocation7], %s437
        %p439 = pneg %p118
        %p440 = pneg %p115
        %s441 = sand.u32 %s33, 1
        %s442 = scalar_lea.sflag [#allocation9], %s441
        %s443 = sand.u32 %s133, 1
        %s444 = smul.addr %s443, 64
        %s445 = scalar_lea.vmem [#allocation8], %s444
        %p446 = pneg %p146
        %p447 = pneg %p143
        %s448 = sand.u32 %s33, 1
        %s449 = scalar_lea.sflag [#allocation9], %s448
        %s450 = sand.u32 %s161, 1
        %s451 = smul.addr %s450, 64
        %s452 = scalar_lea.vmem [#allocation10], %s451
        %p453 = pneg %p174
        %p454 = pneg %p171
        %p455 = pneg %p202
        %p456 = pneg %p199
        %s457 = sand.u32 %s189, 1
        %s458 = scalar_lea.sflag [#allocation4], %s457
        %s459 = sand.u32 %s189, 1
        %s460 = smul.addr %s459, 64
        %s461 = scalar_lea.vmem [#allocation11], %s460
        %p462 = pneg %p230
        %p463 = pneg %p227
        %s464 = sand.u32 %s217, 1
        %s465 = scalar_lea.sflag [#allocation13], %s464
        %s466 = sand.u32 %s217, 1
        %s467 = smul.addr %s466, 64
        %s468 = scalar_lea.vmem [#allocation12], %s467
        %s469 = smul.u32 2, %s37
        %s470 = smul.u32 2, %s37
        %s471 = smul.u32 2, %s37
        %s472 = smul.u32 16, %s37
        %s473 = smul.u32 16, %s37
        %s474 = smul.u32 16, %s37
        %s475 = smul.u32 16, %s37
        %v476 = vld [vmem:[%s374] sm:$0xff]
        %v477 = vld [vmem:[%s374 + $0x8] sm:$0xff]
        %v478 = vld [vmem:[%s384] sm:$0xff]
        %v479 = vld [vmem:[%s384 + $0x8] sm:$0xff]
        %v480 = vld [vmem:[%s394] sm:$0xff]
        %v481 = vld [vmem:[%s394 + $0x8] sm:$0xff]
        %v484 = vrot.slane %v476, 1
        %v485 = vrot.slane %v476, 2
        %v486 = vrot.slane %v476, 3
        %v487 = vrot.slane %v476, 4
        %v488 = vrot.slane %v476, 5
        %v489 = vrot.slane %v476, 6
        %v490 = vrot.slane %v476, 7
        %v491 = vrot.slane %v477, 1
        %v492 = vrot.slane %v477, 2
        %v493 = vrot.slane %v477, 3
        %v494 = vrot.slane %v477, 4
        %v495 = vrot.slane %v477, 5
        %v496 = vrot.slane %v477, 6
        %v497 = vrot.slane %v477, 7
        %v500 = vrot.slane %v478, 1
        %v501 = vrot.slane %v478, 2
        %v502 = vrot.slane %v478, 3
        %v503 = vrot.slane %v478, 4
        %v504 = vrot.slane %v478, 5
        %v505 = vrot.slane %v478, 6
        %v506 = vrot.slane %v478, 7
        %v507 = vrot.slane %v479, 1
        %v508 = vrot.slane %v479, 2
        %v509 = vrot.slane %v479, 3
        %v510 = vrot.slane %v479, 4
        %v511 = vrot.slane %v479, 5
        %v512 = vrot.slane %v479, 6
        %v513 = vrot.slane %v479, 7
        %v516 = vrot.slane %v480, 1
        %v517 = vrot.slane %v480, 2
        %v518 = vrot.slane %v480, 3
        %v519 = vrot.slane %v480, 4
        %v520 = vrot.slane %v480, 5
        %v521 = vrot.slane %v480, 6
        %v522 = vrot.slane %v480, 7
        %v523 = vrot.slane %v481, 1
        %v524 = vrot.slane %v481, 2
        %v525 = vrot.slane %v481, 3
        %v526 = vrot.slane %v481, 4
        %v527 = vrot.slane %v481, 5
        %v528 = vrot.slane %v481, 6
        %v529 = vrot.slane %v481, 7
        %v530 = vld [vmem:[%s404] sm:$0xf]
        %v531 = vld [vmem:[%s404 + $0x4] sm:$0xf]
        %v532 = vld [vmem:[%s404 + $0x8] sm:$0xf]
        %v533 = vld [vmem:[%s404 + $0xc] sm:$0xf]
        %v534 = vld [vmem:[%s404 + $0x10] sm:$0xf]
        %v535 = vld [vmem:[%s404 + $0x14] sm:$0xf]
        %v536 = vld [vmem:[%s404 + $0x18] sm:$0xf]
        %v537 = vld [vmem:[%s404 + $0x1c] sm:$0xf]
        %v538 = vld [vmem:[%s404 + $0x20] sm:$0xf]
        %v539 = vld [vmem:[%s404 + $0x24] sm:$0xf]
        %v540 = vld [vmem:[%s404 + $0x28] sm:$0xf]
        %v541 = vld [vmem:[%s404 + $0x2c] sm:$0xf]
        %v542 = vld [vmem:[%s404 + $0x30] sm:$0xf]
        %v543 = vld [vmem:[%s404 + $0x34] sm:$0xf]
        %v544 = vld [vmem:[%s404 + $0x38] sm:$0xf]
        %v545 = vld [vmem:[%s404 + $0x3c] sm:$0xf]
        %v546 = vld [vmem:[%s414] sm:$0xf]
        %v547 = vld [vmem:[%s414 + $0x4] sm:$0xf]
        %v548 = vld [vmem:[%s414 + $0x8] sm:$0xf]
        %v549 = vld [vmem:[%s414 + $0xc] sm:$0xf]
        %v550 = vld [vmem:[%s414 + $0x10] sm:$0xf]
        %v551 = vld [vmem:[%s414 + $0x14] sm:$0xf]
        %v552 = vld [vmem:[%s414 + $0x18] sm:$0xf]
        %v553 = vld [vmem:[%s414 + $0x1c] sm:$0xf]
        %v554 = vld [vmem:[%s414 + $0x20] sm:$0xf]
        %v555 = vld [vmem:[%s414 + $0x24] sm:$0xf]
        %v556 = vld [vmem:[%s414 + $0x28] sm:$0xf]
        %v557 = vld [vmem:[%s414 + $0x2c] sm:$0xf]
        %v558 = vld [vmem:[%s414 + $0x30] sm:$0xf]
        %v559 = vld [vmem:[%s414 + $0x34] sm:$0xf]
        %v560 = vld [vmem:[%s414 + $0x38] sm:$0xf]
        %v561 = vld [vmem:[%s414 + $0x3c] sm:$0xf]
        %562 = vrot.lane.b32.xlu0 %v530, 127
        %v563 = vpop.permute.xlu0 %562
        %564 = vrot.lane.b32.xlu0 %v531, 127
        %v565 = vpop.permute.xlu0 %564
        %566 = vrot.lane.b32.xlu0 %v532, 127
        %v567 = vpop.permute.xlu0 %566
        %568 = vrot.lane.b32.xlu0 %v533, 127
        %v569 = vpop.permute.xlu0 %568
        %570 = vrot.lane.b32.xlu0 %v534, 127
        %v571 = vpop.permute.xlu0 %570
        %572 = vrot.lane.b32.xlu0 %v535, 127
        %v573 = vpop.permute.xlu0 %572
        %574 = vrot.lane.b32.xlu0 %v536, 127
        %v575 = vpop.permute.xlu0 %574
        %576 = vrot.lane.b32.xlu0 %v537, 127
        %v577 = vpop.permute.xlu0 %576
        %578 = vrot.lane.b32.xlu0 %v538, 127
        %v579 = vpop.permute.xlu0 %578
        %580 = vrot.lane.b32.xlu0 %v539, 127
        %v581 = vpop.permute.xlu0 %580
        %582 = vrot.lane.b32.xlu0 %v540, 127
        %v583 = vpop.permute.xlu0 %582
        %584 = vrot.lane.b32.xlu0 %v541, 127
        %v585 = vpop.permute.xlu0 %584
        %586 = vrot.lane.b32.xlu0 %v542, 127
        %v587 = vpop.permute.xlu0 %586
        %588 = vrot.lane.b32.xlu0 %v543, 127
        %v589 = vpop.permute.xlu0 %588
        %590 = vrot.lane.b32.xlu0 %v544, 127
        %v591 = vpop.permute.xlu0 %590
        %592 = vrot.lane.b32.xlu0 %v545, 127
        %v593 = vpop.permute.xlu0 %592
        %594 = vrot.lane.b32.xlu0 %v530, 1
        %v595 = vpop.permute.xlu0 %594
        %596 = vrot.lane.b32.xlu0 %v531, 1
        %v597 = vpop.permute.xlu0 %596
        %598 = vrot.lane.b32.xlu0 %v532, 1
        %v599 = vpop.permute.xlu0 %598
        %600 = vrot.lane.b32.xlu0 %v533, 1
        %v601 = vpop.permute.xlu0 %600
        %602 = vrot.lane.b32.xlu0 %v534, 1
        %v603 = vpop.permute.xlu0 %602
        %604 = vrot.lane.b32.xlu0 %v535, 1
        %v605 = vpop.permute.xlu0 %604
        %606 = vrot.lane.b32.xlu0 %v536, 1
        %v607 = vpop.permute.xlu0 %606
        %608 = vrot.lane.b32.xlu0 %v537, 1
        %v609 = vpop.permute.xlu0 %608
        %610 = vrot.lane.b32.xlu0 %v538, 1
        %v611 = vpop.permute.xlu0 %610
        %612 = vrot.lane.b32.xlu0 %v539, 1
        %v613 = vpop.permute.xlu0 %612
        %614 = vrot.lane.b32.xlu0 %v540, 1
        %v615 = vpop.permute.xlu0 %614
        %616 = vrot.lane.b32.xlu0 %v541, 1
        %v617 = vpop.permute.xlu0 %616
        %618 = vrot.lane.b32.xlu0 %v542, 1
        %v619 = vpop.permute.xlu0 %618
        %620 = vrot.lane.b32.xlu0 %v543, 1
        %v621 = vpop.permute.xlu0 %620
        %622 = vrot.lane.b32.xlu0 %v544, 1
        %v623 = vpop.permute.xlu0 %622
        %624 = vrot.lane.b32.xlu0 %v545, 1
        %v625 = vpop.permute.xlu0 %624
        %626 = vrot.lane.b32.xlu0 %v546, 127
        %v627 = vpop.permute.xlu0 %626
        %628 = vrot.lane.b32.xlu0 %v547, 127
        %v629 = vpop.permute.xlu0 %628
        %630 = vrot.lane.b32.xlu0 %v548, 127
        %v631 = vpop.permute.xlu0 %630
        %632 = vrot.lane.b32.xlu0 %v549, 127
        %v633 = vpop.permute.xlu0 %632
        %634 = vrot.lane.b32.xlu0 %v550, 127
        %v635 = vpop.permute.xlu0 %634
        %636 = vrot.lane.b32.xlu0 %v551, 127
        %v637 = vpop.permute.xlu0 %636
        %638 = vrot.lane.b32.xlu0 %v552, 127
        %v639 = vpop.permute.xlu0 %638
        %640 = vrot.lane.b32.xlu0 %v553, 127
        %v641 = vpop.permute.xlu0 %640
        %642 = vrot.lane.b32.xlu0 %v554, 127
        %v643 = vpop.permute.xlu0 %642
        %644 = vrot.lane.b32.xlu0 %v555, 127
        %v645 = vpop.permute.xlu0 %644
        %646 = vrot.lane.b32.xlu0 %v556, 127
        %v647 = vpop.permute.xlu0 %646
        %648 = vrot.lane.b32.xlu0 %v557, 127
        %v649 = vpop.permute.xlu0 %648
        %650 = vrot.lane.b32.xlu0 %v558, 127
        %v651 = vpop.permute.xlu0 %650
        %652 = vrot.lane.b32.xlu0 %v559, 127
        %v653 = vpop.permute.xlu0 %652
        %654 = vrot.lane.b32.xlu0 %v560, 127
        %v655 = vpop.permute.xlu0 %654
        %656 = vrot.lane.b32.xlu0 %v561, 127
        %v657 = vpop.permute.xlu0 %656
        %658 = vrot.lane.b32.xlu0 %v546, 1
        %v659 = vpop.permute.xlu0 %658
        %660 = vrot.lane.b32.xlu0 %v547, 1
        %v661 = vpop.permute.xlu0 %660
        %662 = vrot.lane.b32.xlu0 %v548, 1
        %v663 = vpop.permute.xlu0 %662
        %664 = vrot.lane.b32.xlu0 %v549, 1
        %v665 = vpop.permute.xlu0 %664
        %666 = vrot.lane.b32.xlu0 %v550, 1
        %v667 = vpop.permute.xlu0 %666
        %668 = vrot.lane.b32.xlu0 %v551, 1
        %v669 = vpop.permute.xlu0 %668
        %670 = vrot.lane.b32.xlu0 %v552, 1
        %v671 = vpop.permute.xlu0 %670
        %672 = vrot.lane.b32.xlu0 %v553, 1
        %v673 = vpop.permute.xlu0 %672
        %674 = vrot.lane.b32.xlu0 %v554, 1
        %v675 = vpop.permute.xlu0 %674
        %676 = vrot.lane.b32.xlu0 %v555, 1
        %v677 = vpop.permute.xlu0 %676
        %678 = vrot.lane.b32.xlu0 %v556, 1
        %v679 = vpop.permute.xlu0 %678
        %680 = vrot.lane.b32.xlu0 %v557, 1
        %v681 = vpop.permute.xlu0 %680
        %682 = vrot.lane.b32.xlu0 %v558, 1
        %v683 = vpop.permute.xlu0 %682
        %684 = vrot.lane.b32.xlu0 %v559, 1
        %v685 = vpop.permute.xlu0 %684
        %686 = vrot.lane.b32.xlu0 %v560, 1
        %v687 = vpop.permute.xlu0 %686
        %688 = vrot.lane.b32.xlu0 %v561, 1
        %v689 = vpop.permute.xlu0 %688
        %v690 = vperm.slane %v476, 0
        %v691 = vperm.slane %v484, 0
        %v692 = vperm.slane %v485, 0
        %v693 = vperm.slane %v486, 0
        %v694 = vperm.slane %v487, 0
        %v695 = vperm.slane %v488, 0
        %v696 = vperm.slane %v489, 0
        %v697 = vperm.slane %v490, 0
        %v698 = vperm.slane %v477, 0
        %v699 = vperm.slane %v491, 0
        %v700 = vperm.slane %v492, 0
        %v701 = vperm.slane %v493, 0
        %v702 = vperm.slane %v494, 0
        %v703 = vperm.slane %v495, 0
        %v704 = vperm.slane %v496, 0
        %v705 = vperm.slane %v497, 0
        %v722 = vmul.f32 %v530, %v690
        %v723 = vmul.f32 %v531, %v691
        %v724 = vmul.f32 %v532, %v692
        %v725 = vmul.f32 %v533, %v693
        %v726 = vmul.f32 %v534, %v694
        %v727 = vmul.f32 %v535, %v695
        %v728 = vmul.f32 %v536, %v696
        %v729 = vmul.f32 %v537, %v697
        %v730 = vmul.f32 %v538, %v698
        %v731 = vmul.f32 %v539, %v699
        %v732 = vmul.f32 %v540, %v700
        %v733 = vmul.f32 %v541, %v701
        %v734 = vmul.f32 %v542, %v702
        %v735 = vmul.f32 %v543, %v703
        %v736 = vmul.f32 %v544, %v704
        %v737 = vmul.f32 %v545, %v705
        %v738 = vperm.slane %v478, 0
        %v739 = vperm.slane %v500, 0
        %v740 = vperm.slane %v501, 0
        %v741 = vperm.slane %v502, 0
        %v742 = vperm.slane %v503, 0
        %v743 = vperm.slane %v504, 0
        %v744 = vperm.slane %v505, 0
        %v745 = vperm.slane %v506, 0
        %v746 = vperm.slane %v479, 0
        %v747 = vperm.slane %v507, 0
        %v748 = vperm.slane %v508, 0
        %v749 = vperm.slane %v509, 0
        %v750 = vperm.slane %v510, 0
        %v751 = vperm.slane %v511, 0
        %v752 = vperm.slane %v512, 0
        %v753 = vperm.slane %v513, 0
        %v770 = vmul.f32 %v563, %v738
        %v771 = vmul.f32 %v565, %v739
        %v772 = vmul.f32 %v567, %v740
        %v773 = vmul.f32 %v569, %v741
        %v774 = vmul.f32 %v571, %v742
        %v775 = vmul.f32 %v573, %v743
        %v776 = vmul.f32 %v575, %v744
        %v777 = vmul.f32 %v577, %v745
        %v778 = vmul.f32 %v579, %v746
        %v779 = vmul.f32 %v581, %v747
        %v780 = vmul.f32 %v583, %v748
        %v781 = vmul.f32 %v585, %v749
        %v782 = vmul.f32 %v587, %v750
        %v783 = vmul.f32 %v589, %v751
        %v784 = vmul.f32 %v591, %v752
        %v785 = vmul.f32 %v593, %v753
        %v786 = vadd.f32 %v722, %v770
        %v787 = vadd.f32 %v723, %v771
        %v788 = vadd.f32 %v724, %v772
        %v789 = vadd.f32 %v725, %v773
        %v790 = vadd.f32 %v726, %v774
        %v791 = vadd.f32 %v727, %v775
        %v792 = vadd.f32 %v728, %v776
        %v793 = vadd.f32 %v729, %v777
        %v794 = vadd.f32 %v730, %v778
        %v795 = vadd.f32 %v731, %v779
        %v796 = vadd.f32 %v732, %v780
        %v797 = vadd.f32 %v733, %v781
        %v798 = vadd.f32 %v734, %v782
        %v799 = vadd.f32 %v735, %v783
        %v800 = vadd.f32 %v736, %v784
        %v801 = vadd.f32 %v737, %v785
        %v802 = vperm.slane %v480, 0
        %v803 = vperm.slane %v516, 0
        %v804 = vperm.slane %v517, 0
        %v805 = vperm.slane %v518, 0
        %v806 = vperm.slane %v519, 0
        %v807 = vperm.slane %v520, 0
        %v808 = vperm.slane %v521, 0
        %v809 = vperm.slane %v522, 0
        %v810 = vperm.slane %v481, 0
        %v811 = vperm.slane %v523, 0
        %v812 = vperm.slane %v524, 0
        %v813 = vperm.slane %v525, 0
        %v814 = vperm.slane %v526, 0
        %v815 = vperm.slane %v527, 0
        %v816 = vperm.slane %v528, 0
        %v817 = vperm.slane %v529, 0
        %v834 = vmul.f32 %v595, %v802
        %v835 = vmul.f32 %v597, %v803
        %v836 = vmul.f32 %v599, %v804
        %v837 = vmul.f32 %v601, %v805
        %v838 = vmul.f32 %v603, %v806
        %v839 = vmul.f32 %v605, %v807
        %v840 = vmul.f32 %v607, %v808
        %v841 = vmul.f32 %v609, %v809
        %v842 = vmul.f32 %v611, %v810
        %v843 = vmul.f32 %v613, %v811
        %v844 = vmul.f32 %v615, %v812
        %v845 = vmul.f32 %v617, %v813
        %v846 = vmul.f32 %v619, %v814
        %v847 = vmul.f32 %v621, %v815
        %v848 = vmul.f32 %v623, %v816
        %v849 = vmul.f32 %v625, %v817
        %v850 = vadd.f32 %v786, %v834
        %v851 = vadd.f32 %v787, %v835
        %v852 = vadd.f32 %v788, %v836
        %v853 = vadd.f32 %v789, %v837
        %v854 = vadd.f32 %v790, %v838
        %v855 = vadd.f32 %v791, %v839
        %v856 = vadd.f32 %v792, %v840
        %v857 = vadd.f32 %v793, %v841
        %v858 = vadd.f32 %v794, %v842
        %v859 = vadd.f32 %v795, %v843
        %v860 = vadd.f32 %v796, %v844
        %v861 = vadd.f32 %v797, %v845
        %v862 = vadd.f32 %v798, %v846
        %v863 = vadd.f32 %v799, %v847
        %v864 = vadd.f32 %v800, %v848
        %v865 = vadd.f32 %v801, %v849
        %866 = vst [vmem:[%s461] sm:$0xf] %v850
        %867 = vst [vmem:[%s461 + $0x4] sm:$0xf] %v851
        %868 = vst [vmem:[%s461 + $0x8] sm:$0xf] %v852
        %869 = vst [vmem:[%s461 + $0xc] sm:$0xf] %v853
        %870 = vst [vmem:[%s461 + $0x10] sm:$0xf] %v854
        %871 = vst [vmem:[%s461 + $0x14] sm:$0xf] %v855
        %872 = vst [vmem:[%s461 + $0x18] sm:$0xf] %v856
        %873 = vst [vmem:[%s461 + $0x1c] sm:$0xf] %v857
        %874 = vst [vmem:[%s461 + $0x20] sm:$0xf] %v858
        %875 = vst [vmem:[%s461 + $0x24] sm:$0xf] %v859
        %876 = vst [vmem:[%s461 + $0x28] sm:$0xf] %v860
        %877 = vst [vmem:[%s461 + $0x2c] sm:$0xf] %v861
        %878 = vst [vmem:[%s461 + $0x30] sm:$0xf] %v862
        %879 = vst [vmem:[%s461 + $0x34] sm:$0xf] %v863
        %880 = vst [vmem:[%s461 + $0x38] sm:$0xf] %v864
        %881 = vst [vmem:[%s461 + $0x3c] sm:$0xf] %v865
        %v882 = vmul.f32 %v546, %v690
        %v883 = vmul.f32 %v547, %v691
        %v884 = vmul.f32 %v548, %v692
        %v885 = vmul.f32 %v549, %v693
        %v886 = vmul.f32 %v550, %v694
        %v887 = vmul.f32 %v551, %v695
        %v888 = vmul.f32 %v552, %v696
        %v889 = vmul.f32 %v553, %v697
        %v890 = vmul.f32 %v554, %v698
        %v891 = vmul.f32 %v555, %v699
        %v892 = vmul.f32 %v556, %v700
        %v893 = vmul.f32 %v557, %v701
        %v894 = vmul.f32 %v558, %v702
        %v895 = vmul.f32 %v559, %v703
        %v896 = vmul.f32 %v560, %v704
        %v897 = vmul.f32 %v561, %v705
        %v898 = vmul.f32 %v627, %v738
        %v899 = vmul.f32 %v629, %v739
        %v900 = vmul.f32 %v631, %v740
        %v901 = vmul.f32 %v633, %v741
        %v902 = vmul.f32 %v635, %v742
        %v903 = vmul.f32 %v637, %v743
        %v904 = vmul.f32 %v639, %v744
        %v905 = vmul.f32 %v641, %v745
        %v906 = vmul.f32 %v643, %v746
        %v907 = vmul.f32 %v645, %v747
        %v908 = vmul.f32 %v647, %v748
        %v909 = vmul.f32 %v649, %v749
        %v910 = vmul.f32 %v651, %v750
        %v911 = vmul.f32 %v653, %v751
        %v912 = vmul.f32 %v655, %v752
        %v913 = vmul.f32 %v657, %v753
        %v914 = vadd.f32 %v882, %v898
        %v915 = vadd.f32 %v883, %v899
        %v916 = vadd.f32 %v884, %v900
        %v917 = vadd.f32 %v885, %v901
        %v918 = vadd.f32 %v886, %v902
        %v919 = vadd.f32 %v887, %v903
        %v920 = vadd.f32 %v888, %v904
        %v921 = vadd.f32 %v889, %v905
        %v922 = vadd.f32 %v890, %v906
        %v923 = vadd.f32 %v891, %v907
        %v924 = vadd.f32 %v892, %v908
        %v925 = vadd.f32 %v893, %v909
        %v926 = vadd.f32 %v894, %v910
        %v927 = vadd.f32 %v895, %v911
        %v928 = vadd.f32 %v896, %v912
        %v929 = vadd.f32 %v897, %v913
        %v930 = vmul.f32 %v659, %v802
        %v931 = vmul.f32 %v661, %v803
        %v932 = vmul.f32 %v663, %v804
        %v933 = vmul.f32 %v665, %v805
        %v934 = vmul.f32 %v667, %v806
        %v935 = vmul.f32 %v669, %v807
        %v936 = vmul.f32 %v671, %v808
        %v937 = vmul.f32 %v673, %v809
        %v938 = vmul.f32 %v675, %v810
        %v939 = vmul.f32 %v677, %v811
        %v940 = vmul.f32 %v679, %v812
        %v941 = vmul.f32 %v681, %v813
        %v942 = vmul.f32 %v683, %v814
        %v943 = vmul.f32 %v685, %v815
        %v944 = vmul.f32 %v687, %v816
        %v945 = vmul.f32 %v689, %v817
        %v946 = vadd.f32 %v914, %v930
        %v947 = vadd.f32 %v915, %v931
        %v948 = vadd.f32 %v916, %v932
        %v949 = vadd.f32 %v917, %v933
        %v950 = vadd.f32 %v918, %v934
        %v951 = vadd.f32 %v919, %v935
        %v952 = vadd.f32 %v920, %v936
        %v953 = vadd.f32 %v921, %v937
        %v954 = vadd.f32 %v922, %v938
        %v955 = vadd.f32 %v923, %v939
        %v956 = vadd.f32 %v924, %v940
        %v957 = vadd.f32 %v925, %v941
        %v958 = vadd.f32 %v926, %v942
        %v959 = vadd.f32 %v927, %v943
        %v960 = vadd.f32 %v928, %v944
        %v961 = vadd.f32 %v929, %v945
        %962 = vst [vmem:[%s468] sm:$0xf] %v946
        %963 = vst [vmem:[%s468 + $0x4] sm:$0xf] %v947
        %964 = vst [vmem:[%s468 + $0x8] sm:$0xf] %v948
        %965 = vst [vmem:[%s468 + $0xc] sm:$0xf] %v949
        %966 = vst [vmem:[%s468 + $0x10] sm:$0xf] %v950
        %967 = vst [vmem:[%s468 + $0x14] sm:$0xf] %v951
        %968 = vst [vmem:[%s468 + $0x18] sm:$0xf] %v952
        %969 = vst [vmem:[%s468 + $0x1c] sm:$0xf] %v953
        %970 = vst [vmem:[%s468 + $0x20] sm:$0xf] %v954
        %971 = vst [vmem:[%s468 + $0x24] sm:$0xf] %v955
        %972 = vst [vmem:[%s468 + $0x28] sm:$0xf] %v956
        %973 = vst [vmem:[%s468 + $0x2c] sm:$0xf] %v957
        %974 = vst [vmem:[%s468 + $0x30] sm:$0xf] %v958
        %975 = vst [vmem:[%s468 + $0x34] sm:$0xf] %v959
        %976 = vst [vmem:[%s468 + $0x38] sm:$0xf] %v960
        %977 = vst [vmem:[%s468 + $0x3c] sm:$0xf] %v961
        %s978 = sand.u32 %s189, 1
        %s979 = scalar_lea.sflag [#allocation4], %s978
        %s980 = sand.u32 %s189, 1
        %s981 = smul.addr %s980, 64
        %s982 = scalar_lea.vmem [#allocation11], %s981
        %s983 = sand.u32 %s217, 1
        %s984 = scalar_lea.sflag [#allocation13], %s983
        %s985 = sand.u32 %s217, 1
        %s986 = smul.addr %s985, 64
        %s987 = scalar_lea.vmem [#allocation12], %s986
        // Predicated region
        $region61: #{tpu_custom_call.1} parent=39 // pred_check
          %p988 = pneg %p199
        $region62: #{tpu_custom_call.1} parent=39 // pred_check_branch
          %990 = sbr.rel (%p988) target = $region64
        $region63: #{tpu_custom_call.1} parent=39 // pred_region
          %s991 = smul.u32 16, %s37
          %993 = vsyncadd %s979, 0
          %s994 = smul.addr %s38, 128
          %s995 = sadd.s32 %s991, %s994
          %s996 = smul.addr %s995, 4
          %s997 = scalar_lea.hbm %s5, %s996
          %s998 = sshll.u32 %s982, 4
          %s999 = int_to_ptr.vmem [resolvable:$true] %s998
          %s1000 = sshll.u32 %s997, 4
          %s1001 = int_to_ptr.hbm [resolvable:$true] %s1000
          %1006 = dma.vmem_to_hbm [thread:$0]  %s999, 1024, %s1001, %s979, 64, 64, 4
        $region64: #{tpu_custom_call.1} parent=39 // pred_fallthru
          _
        // Predicated region
        $region65: #{tpu_custom_call.1} parent=39 // pred_check
          %p1007 = pneg %p227
        $region66: #{tpu_custom_call.1} parent=39 // pred_check_branch
          %1009 = sbr.rel (%p1007) target = $region68
        $region67: #{tpu_custom_call.1} parent=39 // pred_region
          %s1010 = smul.u32 16, %s37
          %1012 = vsyncadd %s984, 0
          %s1013 = smul.addr %s38, 128
          %s1014 = sadd.s32 %s1010, %s1013
          %s1015 = smul.addr %s1014, 4
          %s1016 = scalar_lea.hbm %s6, %s1015
          %s1017 = sshll.u32 %s987, 4
          %s1018 = int_to_ptr.vmem [resolvable:$true] %s1017
          %s1019 = sshll.u32 %s1016, 4
          %s1020 = int_to_ptr.hbm [resolvable:$true] %s1019
          %1025 = dma.vmem_to_hbm [thread:$0]  %s1018, 1024, %s1020, %s984, 64, 64, 4
        $region68: #{tpu_custom_call.1} parent=39 // pred_fallthru
          _
      $region40: #{tpu_custom_call.1} parent=5 // pred_fallthru
        _
      %p1026 = scmp.le.s32.totalorder 2, %s28
      // Predicated region
      $region69: #{tpu_custom_call.1} parent=5 // pred_check
        %p1027 = pneg %p1026
      $region70: #{tpu_custom_call.1} parent=5 // pred_check_branch
        %1029 = sbr.rel (%p1027) target = $region72
      $region71: #{tpu_custom_call.1} parent=5 // pred_region
        %s1030 = ssub.s32 %s28, 2
        // Predicated region
        $region73: #{tpu_custom_call.1} parent=71 // pred_check
          %p1031 = pneg %p205
        $region74: #{tpu_custom_call.1} parent=71 // pred_check_branch
          %1033 = sbr.rel (%p1031) target = $region76
        $region75: #{tpu_custom_call.1} parent=71 // pred_region
          %s1034 = sand.u32 %s190, 1
          %s1035 = scalar_lea.sflag [#allocation4], %s1034
          %s1036 = sand.u32 %s190, 1
          %s1037 = smul.addr %s1036, 64
          %s1038 = scalar_lea.vmem [#allocation11], %s1037
          %1040 = dma.done %s1035, 1024
        $region76: #{tpu_custom_call.1} parent=71 // pred_fallthru
          _
        // Predicated region
        $region77: #{tpu_custom_call.1} parent=71 // pred_check
          %p1041 = pneg %p233
        $region78: #{tpu_custom_call.1} parent=71 // pred_check_branch
          %1043 = sbr.rel (%p1041) target = $region80
        $region79: #{tpu_custom_call.1} parent=71 // pred_region
          %s1044 = sand.u32 %s218, 1
          %s1045 = scalar_lea.sflag [#allocation13], %s1044
          %s1046 = sand.u32 %s218, 1
          %s1047 = smul.addr %s1046, 64
          %s1048 = scalar_lea.vmem [#allocation12], %s1047
          %1050 = dma.done %s1045, 1024
        $region80: #{tpu_custom_call.1} parent=71 // pred_fallthru
          _
      $region72: #{tpu_custom_call.1} parent=5 // pred_fallthru
        _
    $region6: #{tpu_custom_call.1} parent=1 // loop_footer
      %s32 = sadd.s32 1, %s28
    $region7: #{tpu_custom_call.1} parent=1 // loop_footer_branch
      %27 = sbr.rel target = $region3
    $region8: #{tpu_custom_call.1} parent=1 // loop_exit
      _
    %1051 = vsyncpa [#allocation3], 1
    %s1052 = scalar_lea.sflag [#allocation3], 1
    %1053 = vsyncpa %s1052, 1
    %1054 = vsyncpa [#allocation6], 1
    %s1055 = scalar_lea.sflag [#allocation6], 1
    %1056 = vsyncpa %s1055, 1
    %1057 = vsyncpa [#allocation9], 1
    %s1058 = scalar_lea.sflag [#allocation9], 1
    %1059 = vsyncpa %s1058, 1
    %1060 = vsyncpa [#allocation4], 1
    %s1061 = scalar_lea.sflag [#allocation4], 1
    %1062 = vsyncpa %s1061, 1
    %1063 = vsyncpa [#allocation13], 1
    %s1064 = scalar_lea.sflag [#allocation13], 1
    %1065 = vsyncpa %s1064, 1

</llo_original>
